<compile_context>
chip_gen: v5e
topology: v5e:2x2
jax: 0.10.0
libtpu: 0.0.40
codegen_flags: <defaults>
</compile_context>

<pallas_src>
import jax
import jax.numpy as jnp
from jax import lax
from jax.experimental import pallas as pl
from jax.experimental.pallas import tpu as pltpu


def _make_dwsep_kernel(KH, NB, Ho, WCin, WoCout):
    def kernel(x_ref, wb_ref, b_ref, o_ref):
        # x_ref : (NB, H+2p, W*Cin)   lane-packed, H-pre-padded input
        # wb_ref: (KH, W*Cin, Wo*Cout) banded combined weight (kw + 1x1 folded)
        # b_ref : (1, Wo*Cout)         combined bias, tiled over Wo
        # o_ref : (NB, Ho, Wo*Cout)    lane-packed output
        # Register accumulator, initialized from the folded bias.
        acc = jnp.broadcast_to(b_ref[...].astype(jnp.float32), (NB * Ho, WoCout))
        for kh in range(KH):                      # static unroll: KH fat matmuls
            xk = x_ref[:, kh:kh + Ho, :].astype(jnp.float32)      # (NB, Ho, W*Cin)
            xk = xk.reshape(NB * Ho, WCin)                        # fold batch into M
            acc = acc + jnp.dot(xk, wb_ref[kh].astype(jnp.float32),
                                preferred_element_type=jnp.float32)
        o_ref[...] = acc.reshape(NB, Ho, WoCout).astype(o_ref.dtype)
    return kernel


def dwsep_fold_params(dw_w, dw_b, pw_w, pw_b, W, padding):
    """Fold depthwise + pointwise params into (Wbig, bias). Tiny, one-time."""
    Cin = dw_w.shape[0]
    KH, KW = int(dw_w.shape[2]), int(dw_w.shape[3])
    Cout = int(pw_w.shape[0])
    Wo = W + 2 * padding - KW + 1

    dww = jnp.transpose(dw_w[:, 0, :, :], (1, 2, 0)).astype(jnp.float32)   # (KH,KW,Cin)
    pww = jnp.transpose(pw_w[:, :, 0, 0], (1, 0)).astype(jnp.float32)      # (Cin,Cout)
    wc = dww[..., None] * pww[None, None, :, :]                            # (KH,KW,Cin,Cout)

    # Banded weight: Wbig[kh, wi*Cin+ci, wo*Cout+co] = Wc[kh, wi-wo+pad, ci, co]
    # (zero outside the band -> W-direction padding folded in).
    wi = jnp.arange(W)[:, None]
    wo = jnp.arange(Wo)[None, :]
    kwi = wi - wo + padding                                                # (W, Wo)
    valid = (kwi >= 0) & (kwi < KW)
    wg = wc[:, jnp.clip(kwi, 0, KW - 1), :, :]                             # (KH,W,Wo,Cin,Cout)
    wg = jnp.where(valid[None, :, :, None, None], wg, 0.0)
    wbig = jnp.transpose(wg, (0, 1, 3, 2, 4)).reshape(KH, W * Cin, Wo * Cout)

    # Fold depthwise bias into pointwise bias (exact: everything is linear).
    b_comb = dw_b.astype(jnp.float32) @ pww + pw_b.astype(jnp.float32)     # (Cout,)
    bias = jnp.tile(b_comb, Wo).reshape(1, Wo * Cout)
    return wbig, bias


def dwsep_apply_packed(x_packed, wbig, bias, *, padding=1):
    """Apply the fused conv to lane-packed activations.

    x_packed: (N, H, W*Cin)   returns (N, Ho, Wo*Cout) lane-packed.
    Stacked blocks should stay in this layout between layers.
    """
    N, H, WCin = x_packed.shape
    KH, WCin_w, WoCout = wbig.shape
    assert WCin == WCin_w, "weight / activation packing mismatch"
    Hp = H + 2 * padding
    Ho = Hp - KH + 1

    # H-pre-pad (fuses with upstream packing transpose; no kernel edge cases).
    x_p = jnp.pad(x_packed, ((0, 0), (padding, padding), (0, 0)))

    # --- choose NB (images per grid step) ------------------------------------
    nb = max(1, -(-128 // Ho))      # target NB*Ho >= 128 rows of matmul M
    nb = min(nb, N)
    if N >= 2:
        nb = min(nb, -(-N // 2))    # keep >=2 grid steps for v7x's 2 TensorCores
    grid_len = -(-N // nb)
    Np = grid_len * nb
    if Np > N:                      # pad batch to a whole number of steps
        x_p = jnp.pad(x_p, ((0, Np - N), (0, 0), (0, 0)))

    # VMEM sanity: banded weight + double-buffered in/out blocks must fit easily.
    itm = x_p.dtype.itemsize
    vmem_est = (2 * KH * WCin * WoCout * 4          # wbig (double-buffered)
                + 2 * nb * Hp * WCin * itm          # input blocks
                + 2 * nb * Ho * WoCout * itm)       # output blocks
    assert vmem_est < 16 * 1024 * 1024, (
        "banded-weight formulation exceeds a safe VMEM budget; use a per-tap "
        "(Cin,Cout) matmul formulation for this size")

    kernel = _make_dwsep_kernel(KH, nb, Ho, WCin, WoCout)
    flops = 2 * Np * Ho * KH * WCin * WoCout
    bytes_accessed = (x_p.size * itm + wbig.size * 4 + bias.size * 4
                      + Np * Ho * WoCout * itm)

    out_p = pl.pallas_call(
        kernel,
        out_shape=jax.ShapeDtypeStruct((Np, Ho, WoCout), x_packed.dtype),
        grid_spec=pltpu.PrefetchScalarGridSpec(
            num_scalar_prefetch=0,
            grid=(grid_len,),
            in_specs=[
                pl.BlockSpec((nb, Hp, WCin), lambda g: (g, 0, 0)),
                pl.BlockSpec((KH, WCin, WoCout), lambda g: (0, 0, 0)),
                pl.BlockSpec((1, WoCout), lambda g: (0, 0)),
            ],
            out_specs=pl.BlockSpec((nb, Ho, WoCout), lambda g: (g, 0, 0)),
        ),
        compiler_params=pltpu.CompilerParams(
            dimension_semantics=("parallel",)),
        cost_estimate=pl.CostEstimate(flops=flops, transcendentals=0,
                                      bytes_accessed=bytes_accessed),
    )(x_p, wbig, bias)

    return out_p[:N]


def depthwise_separable_conv(x_nchw, dw_w, dw_b, pw_w, pw_b, *, padding=1):
    """Forward pass of DepthWiseSeperableConv (stride=1, dilation=1).

    x_nchw: (N, Cin, H, W); dw_w: (Cin,1,KH,KW); dw_b: (Cin,);
    pw_w: (Cout,Cin,1,1); pw_b: (Cout,).  Returns (N, Cout, Ho, Wo).
    """
    N, Cin, H, W = x_nchw.shape
    KW = int(dw_w.shape[3])
    Cout = int(pw_w.shape[0])
    Wo = W + 2 * padding - KW + 1

    wbig, bias = dwsep_fold_params(dw_w, dw_b, pw_w, pw_b, W, padding)

    # NCHW -> lane-packed (only at block boundaries; chained layers should
    # stay packed and call dwsep_apply_packed directly).
    x_packed = jnp.transpose(x_nchw, (0, 2, 3, 1)).reshape(N, H, W * Cin)
    out_packed = dwsep_apply_packed(x_packed, wbig, bias, padding=padding)

    Ho = out_packed.shape[1]
    out = out_packed.reshape(N, Ho, Wo, Cout)
    return jnp.transpose(out, (0, 3, 1, 2))


def _reference(x_nchw, dw_w, dw_b, pw_w, pw_b, *, padding=1):
    """Pure-JAX reference (PyTorch semantics) via lax.conv_general_dilated."""
    Cin = x_nchw.shape[1]
    dw = lax.conv_general_dilated(
        x_nchw, dw_w, (1, 1), ((padding, padding), (padding, padding)),
        dimension_numbers=("NCHW", "OIHW", "NCHW"),
        feature_group_count=Cin,
        precision=lax.Precision.HIGHEST,
    ) + dw_b[None, :, None, None]
    pw = lax.conv_general_dilated(
        dw, pw_w, (1, 1), ((0, 0), (0, 0)),
        dimension_numbers=("NCHW", "OIHW", "NCHW"),
        precision=lax.Precision.HIGHEST,
    ) + pw_b[None, :, None, None]
    return pw


if __name__ == "__main__":
    # DepthWiseSeperableConv(in_dim=4, out_dim=8, kernel_size=3, padding=1)
    N, Cin, H, W = 2, 4, 16, 16
    Cout, KH, KW, padding = 8, 3, 3, 1

    key = jax.random.PRNGKey(0)
    k_x, k_dw, k_dwb, k_pw, k_pwb = jax.random.split(key, 5)

    x = jax.random.normal(k_x, (N, Cin, H, W), dtype=jnp.float32)
    dw_w = jax.random.normal(k_dw, (Cin, 1, KH, KW), dtype=jnp.float32) * 0.1
    dw_b = jax.random.normal(k_dwb, (Cin,), dtype=jnp.float32) * 0.1
    pw_w = jax.random.normal(k_pw, (Cout, Cin, 1, 1), dtype=jnp.float32) * 0.1
    pw_b = jax.random.normal(k_pwb, (Cout,), dtype=jnp.float32) * 0.1

    out = depthwise_separable_conv(x, dw_w, dw_b, pw_w, pw_b, padding=padding)
    out = jax.block_until_ready(out)

    ref = _reference(x, dw_w, dw_b, pw_w, pw_b, padding=padding)
    assert out.shape == (N, Cout, H, W), out.shape
    err = float(jnp.max(jnp.abs(out - ref)))
    assert jnp.allclose(out, ref, atol=3e-5, rtol=1e-5), f"max abs err {err}"

    print("KERNEL_OK")
</pallas_src>

<mosaic_0001>
module attributes {stable_mosaic.version = 11 : i64} {
  func.func @kernel(%arg0: i32, %arg1: memref<1x18x64xf32, #tpu.memory_space<vmem>>, %arg2: memref<3x64x128xf32, #tpu.memory_space<vmem>>, %arg3: memref<1x128xf32, #tpu.memory_space<vmem>>, %arg4: memref<1x16x128xf32, #tpu.memory_space<vmem>>) attributes {dimension_semantics = [#tpu.dimension_semantics<parallel>], iteration_bounds = array<i64: 2>, scalar_prefetch = 0 : i64, scratch_operands = 0 : i64, tpu.core_type = #tpu.core_type<tc>, window_params = [{transform_indices = @transform_0, window_bounds = array<i64: 1, 18, 64>}, {pipeline_mode = #tpu.pipeline_mode<synchronous>, transform_indices = @transform_1, window_bounds = array<i64: 3, 64, 128>}, {pipeline_mode = #tpu.pipeline_mode<synchronous>, transform_indices = @transform_2, window_bounds = array<i64: 1, 128>}, {transform_indices = @transform_3, window_bounds = array<i64: 1, 16, 128>}]} {
    %c0 = arith.constant 0 : index
    %c0_0 = arith.constant 0 : index
    %0 = vector.load %arg3[%c0, %c0_0] : memref<1x128xf32, #tpu.memory_space<vmem>>, vector<1x128xf32>
    %1 = vector.shape_cast %0 : vector<1x128xf32> to vector<1x128xf32>
    %2 = vector.broadcast %1 : vector<1x128xf32> to vector<16x128xf32>
    %c0_1 = arith.constant 0 : index
    %c0_2 = arith.constant 0 : index
    %c0_3 = arith.constant 0 : index
    %3 = vector.load %arg1[%c0_1, %c0_2, %c0_3] : memref<1x18x64xf32, #tpu.memory_space<vmem>>, vector<1x16x64xf32>
    %4 = vector.shape_cast %3 : vector<1x16x64xf32> to vector<16x64xf32>
    %c0_4 = arith.constant 0 : index
    %c0_5 = arith.constant 0 : index
    %c0_6 = arith.constant 0 : index
    %5 = vector.load %arg2[%c0_4, %c0_5, %c0_6] : memref<3x64x128xf32, #tpu.memory_space<vmem>>, vector<1x64x128xf32>
    %6 = vector.shape_cast %5 : vector<1x64x128xf32> to vector<64x128xf32>
    %cst = arith.constant dense<0.000000e+00> : vector<16x128xf32>
    %7 = tpu.matmul %4, %6, %cst {dimension_numbers = #tpu.dot_dimension_numbers<[1], [0], [0], [1], [0, 0, 1, 1], [], []>} : vector<16x64xf32>, vector<64x128xf32>, vector<16x128xf32> -> vector<16x128xf32>
    %8 = arith.addf %2, %7 : vector<16x128xf32>
    %c0_7 = arith.constant 0 : index
    %c1 = arith.constant 1 : index
    %c0_8 = arith.constant 0 : index
    %9 = vector.load %arg1[%c0_7, %c1, %c0_8] : memref<1x18x64xf32, #tpu.memory_space<vmem>>, vector<1x16x64xf32>
    %10 = vector.shape_cast %9 : vector<1x16x64xf32> to vector<16x64xf32>
    %c1_9 = arith.constant 1 : index
    %c0_10 = arith.constant 0 : index
    %c0_11 = arith.constant 0 : index
    %11 = vector.load %arg2[%c1_9, %c0_10, %c0_11] : memref<3x64x128xf32, #tpu.memory_space<vmem>>, vector<1x64x128xf32>
    %12 = vector.shape_cast %11 : vector<1x64x128xf32> to vector<64x128xf32>
    %cst_12 = arith.constant dense<0.000000e+00> : vector<16x128xf32>
    %13 = tpu.matmul %10, %12, %cst_12 {dimension_numbers = #tpu.dot_dimension_numbers<[1], [0], [0], [1], [0, 0, 1, 1], [], []>} : vector<16x64xf32>, vector<64x128xf32>, vector<16x128xf32> -> vector<16x128xf32>
    %14 = arith.addf %8, %13 : vector<16x128xf32>
    %c0_13 = arith.constant 0 : index
    %c2 = arith.constant 2 : index
    %c0_14 = arith.constant 0 : index
    %15 = vector.load %arg1[%c0_13, %c2, %c0_14] : memref<1x18x64xf32, #tpu.memory_space<vmem>>, vector<1x16x64xf32>
    %16 = vector.shape_cast %15 : vector<1x16x64xf32> to vector<16x64xf32>
    %c2_15 = arith.constant 2 : index
    %c0_16 = arith.constant 0 : index
    %c0_17 = arith.constant 0 : index
    %17 = vector.load %arg2[%c2_15, %c0_16, %c0_17] : memref<3x64x128xf32, #tpu.memory_space<vmem>>, vector<1x64x128xf32>
    %18 = vector.shape_cast %17 : vector<1x64x128xf32> to vector<64x128xf32>
    %cst_18 = arith.constant dense<0.000000e+00> : vector<16x128xf32>
    %19 = tpu.matmul %16, %18, %cst_18 {dimension_numbers = #tpu.dot_dimension_numbers<[1], [0], [0], [1], [0, 0, 1, 1], [], []>} : vector<16x64xf32>, vector<64x128xf32>, vector<16x128xf32> -> vector<16x128xf32>
    %20 = arith.addf %14, %19 : vector<16x128xf32>
    %21 = vector.shape_cast %20 : vector<16x128xf32> to vector<1x16x128xf32>
    %c0_19 = arith.constant 0 : index
    %c0_20 = arith.constant 0 : index
    %c0_21 = arith.constant 0 : index
    %22 = vector.load %arg4[%c0_19, %c0_20, %c0_21] : memref<1x16x128xf32, #tpu.memory_space<vmem>>, vector<1x16x128xf32>
    tpu.vector_store %arg4[%c0_19, %c0_20, %c0_21], %21 {strides = array<i32>} : memref<1x16x128xf32, #tpu.memory_space<vmem>>, vector<1x16x128xf32>,
    return
  }
  func.func @transform_0(%arg0: i32) -> (i32, i32, i32) {
    %c0_i32 = arith.constant 0 : i32
    %c0_i32_0 = arith.constant 0 : i32
    %c0_i32_1 = arith.constant 0 : i32
    return %arg0, %c0_i32, %c0_i32_0 : i32, i32, i32
  }
  func.func @transform_1(%arg0: i32) -> (i32, i32, i32) {
    %c0_i32 = arith.constant 0 : i32
    %c0_i32_0 = arith.constant 0 : i32
    %c0_i32_1 = arith.constant 0 : i32
    %c0_i32_2 = arith.constant 0 : i32
    return %c0_i32, %c0_i32_0, %c0_i32_1 : i32, i32, i32
  }
  func.func @transform_2(%arg0: i32) -> (i32, i32) {
    %c0_i32 = arith.constant 0 : i32
    %c0_i32_0 = arith.constant 0 : i32
    %c0_i32_1 = arith.constant 0 : i32
    return %c0_i32, %c0_i32_0 : i32, i32
  }
  func.func @transform_3(%arg0: i32) -> (i32, i32, i32) {
    %c0_i32 = arith.constant 0 : i32
    %c0_i32_0 = arith.constant 0 : i32
    %c0_i32_1 = arith.constant 0 : i32
    return %arg0, %c0_i32, %c0_i32_0 : i32, i32, i32
  }
}

</mosaic_0001>

<llo_original>
// kernel: tpu_custom_call.1
$region0: #{tpu_custom_call.1}
  #allocation0 [shape = 'u32[]', space=smem, size = 0x4, offset = 0x4, fixed_abs, tag = 'smem constant byte address 0x4 - core index']
  #allocation1 [shape = 'u32[72,128]{1,0:T(1,128)}', space=vmem, size = 0x9000, scoped, tag = 'internal scratch']
  %s0 = inlined_call_operand.vmem [shape: f32[2,18,64], index: 0, kind: input, shape index: {}]
  %s1 = inlined_call_operand.hbm [shape: f32[3,64,128], index: 1, kind: input, shape index: {}]
  %s2 = inlined_call_operand.vmem [shape: f32[1,128], index: 2, kind: input, shape index: {}]
  %s3 = inlined_call_operand.hbm [shape: f32[2,16,128], index: 3, kind: output, shape index: {}]
  %s4 = sld [smem:[#allocation0]]
  $region49: #{tpu_custom_call.1} parent=0
    _
  %s6 = ssub.s32 1, %s4
  %s7 = scalar_select 0, %s6, %s4
  $region1: #{tpu_custom_call.1} parent=0
    #allocation2 [shape = 'u8[98304]{0}', space=vmem, size = 0x18000, scoped, tag = 'input window, operand 1, single buffered']
    #allocation3 [shape = 's32[2]{0}', space=sflag, size = 0x8, scoped, tag = 'scoped memory for tpu_custom_call.1']
    #allocation4 [shape = 's32[2]{0}', space=sflag, size = 0x8, scoped, tag = 'scoped memory for tpu_custom_call.1']
    #allocation5 [shape = 'u8[16384]{0}', space=vmem, size = 0x4000, scoped, tag = 'output window, operand 0']
    %8 = vsyncpa [#allocation3], 0
    %9 = vsyncpa [#allocation4], 0
    %s10 = scalar_lea.sflag [#allocation4], 1
    %11 = vsyncpa %s10, 0
    loop: start=0, step=1, limit=4
    $region2: #{tpu_custom_call.1} parent=1 // loop_pre_header
      _
    $region3: #{tpu_custom_call.1} parent=1 // loop_header
      %s13 = sphi 0, %s17
      %p14 = scmp.ge.s32.totalorder %s13, 4
      %s23 = sphi 0, %s25
      %s26 = sphi 0, %s23
      %s27 = sphi 0, %s26
      %s43 = sphi 0, %s27
      %s47 = sphi 0, %s47
      %s49 = sphi 0, %s47
      %s50 = sphi 0, %s49
      %s64 = sphi 0, %s50
      %s68 = sphi 0, %s68
      %s70 = sphi 0, %s68
      %s71 = sphi 0, %s70
      %s85 = sphi 0, %s71
      %s91 = sphi 0, %s93
      %s94 = sphi 0, %s91
      %s95 = sphi 0, %s94
      %s111 = sphi 0, %s95
    $region4: #{tpu_custom_call.1} parent=1 // loop_header_branch
      %16 = sbr.rel (%p14) target = $region8
    $region5: #{tpu_custom_call.1} parent=1 // loop_body
      %s18 = ssub.s32 %s13, 1
      %s19 = ssub.s32 %s13, 2
      %s20 = sadd.s32 %s13, 1
      %s21 = ssub.s32 %s13, %s20
      %p22 = scmp.eq.s32.totalorder %s21, 0
      %s24 = sadd.s32 %s23, 1
      %s25 = scalar_select %p22, %s23, %s24
      %p28 = pneg %p22
      %p29 = scmp.eq.s32.totalorder %s13, 1
      %p30 = por %p28, %p29
      %p31 = scmp.ne.s32.totalorder %s23, %s26
      %p32 = scmp.eq.s32.totalorder %s13, 0
      %p33 = por %p31, %p32
      %p34 = scmp.ne.s32.totalorder %s23, %s26
      %p35 = scmp.eq.s32.totalorder %s18, 1
      %p36 = por %p34, %p35
      %p37 = scmp.ne.s32.totalorder %s26, %s27
      %p38 = scmp.eq.s32.totalorder %s18, 0
      %p39 = por %p37, %p38
      %p40 = scmp.ne.s32.totalorder %s26, %s27
      %p41 = scmp.eq.s32.totalorder %s19, 1
      %p42 = por %p40, %p41
      %p44 = scmp.ne.s32.totalorder %s27, %s43
      %p45 = scmp.eq.s32.totalorder %s19, 0
      %p46 = por %p44, %p45
      %s48 = sadd.s32 %s47, 1
      %p51 = scmp.eq.s32.totalorder %s13, 1
      %p52 = scmp.ne.s32.totalorder %s47, %s49
      %p53 = scmp.eq.s32.totalorder %s13, 0
      %p54 = por %p52, %p53
      %p55 = scmp.ne.s32.totalorder %s47, %s49
      %p56 = scmp.eq.s32.totalorder %s18, 1
      %p57 = por %p55, %p56
      %p58 = scmp.ne.s32.totalorder %s49, %s50
      %p59 = scmp.eq.s32.totalorder %s18, 0
      %p60 = por %p58, %p59
      %p61 = scmp.ne.s32.totalorder %s49, %s50
      %p62 = scmp.eq.s32.totalorder %s19, 1
      %p63 = por %p61, %p62
      %p65 = scmp.ne.s32.totalorder %s50, %s64
      %p66 = scmp.eq.s32.totalorder %s19, 0
      %p67 = por %p65, %p66
      %s69 = sadd.s32 %s68, 1
      %p72 = scmp.eq.s32.totalorder %s13, 1
      %p73 = scmp.ne.s32.totalorder %s68, %s70
      %p74 = scmp.eq.s32.totalorder %s13, 0
      %p75 = por %p73, %p74
      %p76 = scmp.ne.s32.totalorder %s68, %s70
      %p77 = scmp.eq.s32.totalorder %s18, 1
      %p78 = por %p76, %p77
      %p79 = scmp.ne.s32.totalorder %s70, %s71
      %p80 = scmp.eq.s32.totalorder %s18, 0
      %p81 = por %p79, %p80
      %p82 = scmp.ne.s32.totalorder %s70, %s71
      %p83 = scmp.eq.s32.totalorder %s19, 1
      %p84 = por %p82, %p83
      %p86 = scmp.ne.s32.totalorder %s71, %s85
      %p87 = scmp.eq.s32.totalorder %s19, 0
      %p88 = por %p86, %p87
      %s89 = ssub.s32 %s13, %s20
      %p90 = scmp.eq.s32.totalorder %s89, 0
      %s92 = sadd.s32 %s91, 1
      %s93 = scalar_select %p90, %s91, %s92
      %p96 = pneg %p90
      %p97 = scmp.eq.s32.totalorder %s13, 1
      %p98 = por %p96, %p97
      %p99 = scmp.ne.s32.totalorder %s91, %s94
      %p100 = scmp.eq.s32.totalorder %s13, 0
      %p101 = por %p99, %p100
      %p102 = scmp.ne.s32.totalorder %s91, %s94
      %p103 = scmp.eq.s32.totalorder %s18, 1
      %p104 = por %p102, %p103
      %p105 = scmp.ne.s32.totalorder %s94, %s95
      %p106 = scmp.eq.s32.totalorder %s18, 0
      %p107 = por %p105, %p106
      %p108 = scmp.ne.s32.totalorder %s94, %s95
      %p109 = scmp.eq.s32.totalorder %s19, 1
      %p110 = por %p108, %p109
      %p112 = scmp.ne.s32.totalorder %s95, %s111
      %p113 = scmp.eq.s32.totalorder %s19, 0
      %p114 = por %p112, %p113
      %p115 = scmp.le.s32.totalorder 1, %s13
      %p116 = scmp.lt.s32.totalorder %s13, 3
      %p117 = pnand %p115, %p116
      %p118 = pneg %p117
      // Predicated region
      $region9: #{tpu_custom_call.1} parent=5 // pred_check
        _
      $region10: #{tpu_custom_call.1} parent=5 // pred_check_branch
        %120 = sbr.rel (%p117) target = $region12
      $region11: #{tpu_custom_call.1} parent=5 // pred_region
        %s121 = ssub.s32 %s13, 1
        // Predicated region
        $region13: #{tpu_custom_call.1} parent=11 // pred_check
          %p122 = pneg %p60
        $region14: #{tpu_custom_call.1} parent=11 // pred_check_branch
          %124 = sbr.rel (%p122) target = $region16
        $region15: #{tpu_custom_call.1} parent=11 // pred_region
          %126 = vsyncadd [#allocation3], 0
          %s127 = sshll.u32 %s1, 4
          %s128 = int_to_ptr.hbm [resolvable:$true] %s127
          %s129 = sshll.u32 [#allocation2], 4
          %s130 = int_to_ptr.vmem [resolvable:$true] %s129
          %135 = dma.hbm_to_vmem [thread:$0]  %s128, 3072, %s130, [#allocation3], 128, 128, 8
        $region16: #{tpu_custom_call.1} parent=11 // pred_fallthru
          _
        // Predicated region
        $region17: #{tpu_custom_call.1} parent=11 // pred_check
          %p136 = pneg %p81
        $region18: #{tpu_custom_call.1} parent=11 // pred_check_branch
          %138 = sbr.rel (%p136) target = $region20
        $region19: #{tpu_custom_call.1} parent=11 // pred_region
          _
        $region20: #{tpu_custom_call.1} parent=11 // pred_fallthru
          _
      $region12: #{tpu_custom_call.1} parent=5 // pred_fallthru
        _
      %p139 = scmp.lt.s32.totalorder %s13, 2
      // Predicated region
      $region21: #{tpu_custom_call.1} parent=5 // pred_check
        %p140 = pneg %p139
      $region22: #{tpu_custom_call.1} parent=5 // pred_check_branch
        %142 = sbr.rel (%p140) target = $region24
      $region23: #{tpu_custom_call.1} parent=5 // pred_region
        // Predicated region
        $region25: #{tpu_custom_call.1} parent=23 // pred_check
          %p143 = pneg %p33
        $region26: #{tpu_custom_call.1} parent=23 // pred_check_branch
          %145 = sbr.rel (%p143) target = $region28
        $region27: #{tpu_custom_call.1} parent=23 // pred_region
          %p146 = scmp.lt.s32.totalorder %s13, 1
          %s147 = scalar_select %p146, %s13, 1
          %s148 = smul.addr %s147, 3
          %s149 = smul.addr %s148, 8
          %s150 = scalar_lea.vmem %s0, %s149
        $region28: #{tpu_custom_call.1} parent=23 // pred_fallthru
          _
      $region24: #{tpu_custom_call.1} parent=5 // pred_fallthru
        _
      %p151 = scmp.le.s32.totalorder 1, %s13
      %p152 = scmp.lt.s32.totalorder %s13, 3
      %p153 = pnand %p151, %p152
      %p154 = pneg %p153
      // Predicated region
      $region29: #{tpu_custom_call.1} parent=5 // pred_check
        _
      $region30: #{tpu_custom_call.1} parent=5 // pred_check_branch
        %156 = sbr.rel (%p153) target = $region32
      $region31: #{tpu_custom_call.1} parent=5 // pred_region
        %s157 = ssub.s32 %s13, 1
        // Predicated region
        $region33: #{tpu_custom_call.1} parent=31 // pred_check
          %p158 = pneg %p60
        $region34: #{tpu_custom_call.1} parent=31 // pred_check_branch
          %160 = sbr.rel (%p158) target = $region36
        $region35: #{tpu_custom_call.1} parent=31 // pred_region
          %162 = dma.done [#allocation3], 3072
        $region36: #{tpu_custom_call.1} parent=31 // pred_fallthru
          _
        %p163 = scmp.lt.s32.totalorder %s18, 1
        %s164 = scalar_select %p163, %s18, 1
        %s165 = smul.addr %s164, 3
        %s166 = smul.addr %s165, 8
        %s167 = scalar_lea.vmem %s0, %s166
        %p168 = pneg %p39
        %p169 = pneg %p36
        %p170 = pneg %p60
        %p171 = pneg %p57
        %p172 = pneg %p81
        %p173 = pneg %p78
        %p174 = pneg %p107
        %p175 = pneg %p104
        %s176 = sand.u32 %s94, 1
        %s177 = scalar_lea.sflag [#allocation4], %s176
        %s178 = sand.u32 %s94, 1
        %s179 = smul.addr %s178, 16
        %s180 = scalar_lea.vmem [#allocation5], %s179
        %p181 = scmp.lt.s32.totalorder %s18, 1
        %s182 = scalar_select %p181, %s18, 1
        %s183 = smul.addr %s182, 3
        %s184 = smul.addr %s183, 8
        %s185 = scalar_lea.vmem %s0, %s184
        %v186 = vld [vmem:[%s2] sm:$0x1]
        %v188 = vperm.slane %v186, 0
        %v190 = vld [vmem:[%s185] sm:$0xff]
        %v191 = vld [vmem:[%s185 + $0x8] sm:$0xff]
        %v192 = vld [vmem:[#allocation2] sm:$0xff]
        %v193 = vld [vmem:[#allocation2 + $0x8] sm:$0xff]
        %v194 = vld [vmem:[#allocation2 + $0x10] sm:$0xff]
        %v195 = vld [vmem:[#allocation2 + $0x18] sm:$0xff]
        %v196 = vld [vmem:[#allocation2 + $0x20] sm:$0xff]
        %v197 = vld [vmem:[#allocation2 + $0x28] sm:$0xff]
        %v198 = vld [vmem:[#allocation2 + $0x30] sm:$0xff]
        %v199 = vld [vmem:[#allocation2 + $0x38] sm:$0xff]
        %vm200 = vcmask 523264
        %v202 = vsel %vm200, %v190, 0
        %v205 = vsel %vm200, %v191, 0
        %207 = vmatpush.msra.mxu0 0.0
        %208 = vmatpush.msra.mxu0 0.0
        %209 = vmatpush.msra.mxu0 0.0
        %210 = vmatpush.msra.mxu0 0.0
        %211 = vmatpush.msra.mxu0 0.0
        %212 = vmatpush.msra.mxu0 0.0
        %213 = vmatpush.msra.mxu0 0.0
        %214 = vmatpush.msra.mxu0 0.0
        %215 = vmatpush.msra.mxu0 %v199
        %216 = vmatpush.msra.mxu0 %v198
        %217 = vmatpush.msra.mxu0 %v197
        %218 = vmatpush.msra.mxu0 %v196
        %219 = vmatpush.msra.mxu0 %v195
        %220 = vmatpush.msra.mxu0 %v194
        %221 = vmatpush.msra.mxu0 %v193
        %222 = vmatpush.msra.mxu0 %v192
        %223 = vmatmul.f32.gmra.mxu0 %v202
        %v224 = vpop.f32.mrf.mxu0
        %v225 = vadd.f32 0.0, %v224
        %226 = vmatmul.f32.gmra.mxu0 %v205
        %v227 = vpop.f32.mrf.mxu0
        %v228 = vadd.f32 0.0, %v227
        %229 = vdwg.mxu0
        %v230 = vadd.f32 %v188, %v225
        %v231 = vadd.f32 %v188, %v228
        %v232 = vld [vmem:[%s185 + $0x1] sm:$0xff]
        %v233 = vld [vmem:[%s185 + $0x9] sm:$0xff]
        %s234 = scalar_lea.vmem [#allocation2], 64
        %v235 = vld [vmem:[%s234] sm:$0xff]
        %v236 = vld [vmem:[%s234 + $0x8] sm:$0xff]
        %v237 = vld [vmem:[%s234 + $0x10] sm:$0xff]
        %v238 = vld [vmem:[%s234 + $0x18] sm:$0xff]
        %v239 = vld [vmem:[%s234 + $0x20] sm:$0xff]
        %v240 = vld [vmem:[%s234 + $0x28] sm:$0xff]
        %v241 = vld [vmem:[%s234 + $0x30] sm:$0xff]
        %v242 = vld [vmem:[%s234 + $0x38] sm:$0xff]
        %v244 = vsel %vm200, %v232, 0
        %v247 = vsel %vm200, %v233, 0
        %249 = vmatpush.msra.mxu0 0.0
        %250 = vmatpush.msra.mxu0 0.0
        %251 = vmatpush.msra.mxu0 0.0
        %252 = vmatpush.msra.mxu0 0.0
        %253 = vmatpush.msra.mxu0 0.0
        %254 = vmatpush.msra.mxu0 0.0
        %255 = vmatpush.msra.mxu0 0.0
        %256 = vmatpush.msra.mxu0 0.0
        %257 = vmatpush.msra.mxu0 %v242
        %258 = vmatpush.msra.mxu0 %v241
        %259 = vmatpush.msra.mxu0 %v240
        %260 = vmatpush.msra.mxu0 %v239
        %261 = vmatpush.msra.mxu0 %v238
        %262 = vmatpush.msra.mxu0 %v237
        %263 = vmatpush.msra.mxu0 %v236
        %264 = vmatpush.msra.mxu0 %v235
        %265 = vmatmul.f32.gmra.mxu0 %v244
        %v266 = vpop.f32.mrf.mxu0
        %v267 = vadd.f32 0.0, %v266
        %268 = vmatmul.f32.gmra.mxu0 %v247
        %v269 = vpop.f32.mrf.mxu0
        %v270 = vadd.f32 0.0, %v269
        %271 = vdwg.mxu0
        %v272 = vadd.f32 %v230, %v267
        %v273 = vadd.f32 %v231, %v270
        %v274 = vld [vmem:[%s185 + $0x2] sm:$0xff]
        %v275 = vld [vmem:[%s185 + $0xa] sm:$0xff]
        %s276 = scalar_lea.vmem [#allocation2], 128
        %v277 = vld [vmem:[%s276] sm:$0xff]
        %v278 = vld [vmem:[%s276 + $0x8] sm:$0xff]
        %v279 = vld [vmem:[%s276 + $0x10] sm:$0xff]
        %v280 = vld [vmem:[%s276 + $0x18] sm:$0xff]
        %v281 = vld [vmem:[%s276 + $0x20] sm:$0xff]
        %v282 = vld [vmem:[%s276 + $0x28] sm:$0xff]
        %v283 = vld [vmem:[%s276 + $0x30] sm:$0xff]
        %v284 = vld [vmem:[%s276 + $0x38] sm:$0xff]
        %v286 = vsel %vm200, %v274, 0
        %v289 = vsel %vm200, %v275, 0
        %291 = vmatpush.msra.mxu0 0.0
        %292 = vmatpush.msra.mxu0 0.0
        %293 = vmatpush.msra.mxu0 0.0
        %294 = vmatpush.msra.mxu0 0.0
        %295 = vmatpush.msra.mxu0 0.0
        %296 = vmatpush.msra.mxu0 0.0
        %297 = vmatpush.msra.mxu0 0.0
        %298 = vmatpush.msra.mxu0 0.0
        %299 = vmatpush.msra.mxu0 %v284
        %300 = vmatpush.msra.mxu0 %v283
        %301 = vmatpush.msra.mxu0 %v282
        %302 = vmatpush.msra.mxu0 %v281
        %303 = vmatpush.msra.mxu0 %v280
        %304 = vmatpush.msra.mxu0 %v279
        %305 = vmatpush.msra.mxu0 %v278
        %306 = vmatpush.msra.mxu0 %v277
        %307 = vmatmul.f32.gmra.mxu0 %v286
        %v308 = vpop.f32.mrf.mxu0
        %v309 = vadd.f32 0.0, %v308
        %310 = vmatmul.f32.gmra.mxu0 %v289
        %v311 = vpop.f32.mrf.mxu0
        %v312 = vadd.f32 0.0, %v311
        %313 = vdwg.mxu0
        %v314 = vadd.f32 %v272, %v309
        %v315 = vadd.f32 %v273, %v312
        %316 = vst [vmem:[%s180] sm:$0xff] %v314
        %317 = vst [vmem:[%s180 + $0x8] sm:$0xff] %v315
        %s318 = sand.u32 %s94, 1
        %s319 = scalar_lea.sflag [#allocation4], %s318
        %s320 = sand.u32 %s94, 1
        %s321 = smul.addr %s320, 16
        %s322 = scalar_lea.vmem [#allocation5], %s321
        // Predicated region
        $region37: #{tpu_custom_call.1} parent=31 // pred_check
          %p323 = pneg %p104
        $region38: #{tpu_custom_call.1} parent=31 // pred_check_branch
          %325 = sbr.rel (%p323) target = $region40
        $region39: #{tpu_custom_call.1} parent=31 // pred_region
          %327 = vsyncadd %s319, 0
          %s328 = smul.addr %s18, 2
          %s329 = smul.addr %s328, 8
          %s330 = scalar_lea.hbm %s3, %s329
          %s331 = sshll.u32 %s322, 4
          %s332 = int_to_ptr.vmem [resolvable:$true] %s331
          %s333 = sshll.u32 %s330, 4
          %s334 = int_to_ptr.hbm [resolvable:$true] %s333
          %339 = dma.vmem_to_hbm [thread:$0]  %s332, 256, %s334, %s319, 128, 128, 8
        $region40: #{tpu_custom_call.1} parent=31 // pred_fallthru
          _
      $region32: #{tpu_custom_call.1} parent=5 // pred_fallthru
        _
      %p340 = scmp.le.s32.totalorder 2, %s13
      // Predicated region
      $region41: #{tpu_custom_call.1} parent=5 // pred_check
        %p341 = pneg %p340
      $region42: #{tpu_custom_call.1} parent=5 // pred_check_branch
        %343 = sbr.rel (%p341) target = $region44
      $region43: #{tpu_custom_call.1} parent=5 // pred_region
        %s344 = ssub.s32 %s13, 2
        // Predicated region
        $region45: #{tpu_custom_call.1} parent=43 // pred_check
          %p345 = pneg %p110
        $region46: #{tpu_custom_call.1} parent=43 // pred_check_branch
          %347 = sbr.rel (%p345) target = $region48
        $region47: #{tpu_custom_call.1} parent=43 // pred_region
          %s348 = sand.u32 %s95, 1
          %s349 = scalar_lea.sflag [#allocation4], %s348
          %s350 = sand.u32 %s95, 1
          %s351 = smul.addr %s350, 16
          %s352 = scalar_lea.vmem [#allocation5], %s351
          %354 = dma.done %s349, 256
        $region48: #{tpu_custom_call.1} parent=43 // pred_fallthru
          _
      $region44: #{tpu_custom_call.1} parent=5 // pred_fallthru
        _
    $region6: #{tpu_custom_call.1} parent=1 // loop_footer
      %s17 = sadd.s32 1, %s13
    $region7: #{tpu_custom_call.1} parent=1 // loop_footer_branch
      %12 = sbr.rel target = $region3
    $region8: #{tpu_custom_call.1} parent=1 // loop_exit
      _
    %355 = vsyncpa [#allocation3], 1
    %s356 = scalar_lea.sflag [#allocation3], 1
    %357 = vsyncpa %s356, 1
    %358 = vsyncpa [#allocation4], 1
    %s359 = scalar_lea.sflag [#allocation4], 1
    %360 = vsyncpa %s359, 1

</llo_original>
